<compile_context>
chip_gen: v7x
topology: tpu7x:2x2x1
jax: 0.10.0
libtpu: 0.0.40
codegen_flags: <defaults>
</compile_context>

<pallas_src>
import functools
import math

import jax
import jax.numpy as jnp
from jax.experimental import pallas as pl
from jax.experimental.pallas import tpu as pltpu


# ----------------------------------------------------------------------------
# Fused MLP kernel: chain of (matmul + bias [+ exact GELU]) on one row tile.
# ----------------------------------------------------------------------------
def _fused_mlp_kernel(*refs, n_layers: int, matmul_dtype):
    x_ref = refs[0]
    o_ref = refs[-1]
    wb_refs = refs[1:-1]                       # w0, b0, w1, b1, ...

    h = x_ref[...].astype(jnp.float32)         # (tm, K0)
    inv_sqrt2 = jnp.float32(1.0 / math.sqrt(2.0))

    for li in range(n_layers):                 # static Python loop, traced once
        w = wb_refs[2 * li][...]               # (K_l, N_l), resident in VMEM
        b = wb_refs[2 * li + 1][...]           # (1, N_l)
        # MXU matmul; optionally bf16 inputs, always f32 accumulation.
        y = jnp.dot(h.astype(matmul_dtype), w.astype(matmul_dtype),
                    preferred_element_type=jnp.float32)
        y = y + b                              # f32 epilogue (v5e-safe)
        if li < n_layers - 1:
            # exact erf GELU == PyTorch nn.GELU() default
            y = 0.5 * y * (1.0 + jax.lax.erf(y * inv_sqrt2))
        h = y

    o_ref[...] = h.astype(o_ref.dtype)


# ----------------------------------------------------------------------------
# Wrapper: flatten leading dims, build specs, one pallas_call for the whole MLP.
# ----------------------------------------------------------------------------
def fcn_single_forward(params, in_var, *, tm: int = 512,
                       matmul_dtype=jnp.float32):
    """params: list of (W: (in, out), b: (out,)). in_var: (batch, ..., planes[0])."""
    lead_shape = in_var.shape[:-1]
    x = in_var.reshape(-1, in_var.shape[-1]).astype(jnp.float32)
    M, K0 = x.shape
    n_layers = len(params)
    n_out = params[-1][0].shape[1]

    # Row tile: as large as useful, 8-aligned, never bigger than the 8-cover of M.
    tm = max(8, min(tm, pl.cdiv(M, 8) * 8))
    grid = (pl.cdiv(M, tm),)                   # Pallas masks the ragged last block

    in_specs = [pl.BlockSpec((tm, K0), lambda i: (i, 0))]
    flat_wb = []
    for (w, b) in params:
        k_in, k_out = w.shape
        in_specs.append(pl.BlockSpec((k_in, k_out), lambda i: (0, 0)))   # resident
        in_specs.append(pl.BlockSpec((1, k_out), lambda i: (0, 0)))      # resident
        flat_wb.append(w)
        flat_wb.append(b.reshape(1, k_out))

    flops = sum(2 * M * w.shape[0] * w.shape[1] for (w, _) in params)
    transcendentals = sum(M * w.shape[1] for (w, _) in params[:-1])
    bytes_accessed = (x.size + sum(a.size for a in flat_wb) + M * n_out) * 4

    kernel = functools.partial(_fused_mlp_kernel, n_layers=n_layers,
                               matmul_dtype=matmul_dtype)

    out = pl.pallas_call(
        kernel,
        out_shape=jax.ShapeDtypeStruct((M, n_out), jnp.float32),
        grid_spec=pltpu.PrefetchScalarGridSpec(
            num_scalar_prefetch=0,
            grid=grid,
            in_specs=in_specs,
            out_specs=pl.BlockSpec((tm, n_out), lambda i: (i, 0)),
        ),
        compiler_params=pltpu.CompilerParams(
            dimension_semantics=("parallel",),
        ),
        cost_estimate=pl.CostEstimate(
            flops=flops,
            transcendentals=transcendentals,
            bytes_accessed=bytes_accessed),
    )(x, *flat_wb)

    return out.reshape(*lead_shape, n_out)


# ----------------------------------------------------------------------------
# Parameter init (xavier_uniform weights, zero bias) to match reset_parameters().
# ----------------------------------------------------------------------------
def init_fcn_single(key, planes):
    params = []
    for i in range(len(planes) - 1):
        fan_in, fan_out = planes[i], planes[i + 1]
        key, sub = jax.random.split(key)
        bound = math.sqrt(6.0 / (fan_in + fan_out))  # xavier_uniform, gain=1
        w = jax.random.uniform(sub, (fan_in, fan_out), dtype=jnp.float32,
                               minval=-bound, maxval=bound)
        b = jnp.zeros((fan_out,), dtype=jnp.float32)
        params.append((w, b))
    return params


# Pure-JAX reference for sanity checking.
def fcn_single_ref(params, in_var):
    x = in_var.astype(jnp.float32)
    n_layers = len(params)
    for li, (w, b) in enumerate(params):
        x = x @ w + b
        if li < n_layers - 1:
            x = jax.nn.gelu(x, approximate=False)
    return x


if __name__ == "__main__":
    planes = [32, 64, 64, 16]            # FcnSingle(planes=[32, 64, 64, 16])
    key = jax.random.PRNGKey(0)
    kp, kx = jax.random.split(key)

    params = init_fcn_single(kp, planes)

    # in_var: (batch_size, ..., input_dim) = (2, 8, 32)
    x = jax.random.normal(kx, (2, 8, planes[0]), dtype=jnp.float32)

    ref = fcn_single_ref(params, x)

    # f32 path: bit-for-bit semantics of the PyTorch module.
    out = fcn_single_forward(params, x)
    out = jax.block_until_ready(out)
    assert out.shape == (2, 8, planes[-1])
    assert jnp.allclose(out, ref, atol=1e-4, rtol=1e-4)

    # bf16-matmul path (v6e/v7x MXU-native), f32 accumulate + f32 epilogue.
    out_bf16 = fcn_single_forward(params, x, matmul_dtype=jnp.bfloat16)
    out_bf16 = jax.block_until_ready(out_bf16)
    assert out_bf16.shape == (2, 8, planes[-1])
    assert jnp.allclose(out_bf16, ref, atol=5e-2, rtol=5e-2)

    print("KERNEL_OK")
</pallas_src>

<mosaic_0001>
module attributes {stable_mosaic.version = 11 : i64} {
  func.func @_fused_mlp_kernel(%arg0: i32, %arg1: memref<16x32xf32, #tpu.memory_space<vmem>>, %arg2: memref<32x64xf32, #tpu.memory_space<vmem>>, %arg3: memref<1x64xf32, #tpu.memory_space<vmem>>, %arg4: memref<64x64xf32, #tpu.memory_space<vmem>>, %arg5: memref<1x64xf32, #tpu.memory_space<vmem>>, %arg6: memref<64x16xf32, #tpu.memory_space<vmem>>, %arg7: memref<1x16xf32, #tpu.memory_space<vmem>>, %arg8: memref<16x16xf32, #tpu.memory_space<vmem>>) attributes {dimension_semantics = [#tpu.dimension_semantics<parallel>], iteration_bounds = array<i64: 1>, scalar_prefetch = 0 : i64, scratch_operands = 0 : i64, tpu.core_type = #tpu.core_type<tc>, window_params = [{transform_indices = @transform_0, window_bounds = array<i64: 16, 32>}, {pipeline_mode = #tpu.pipeline_mode<synchronous>, transform_indices = @transform_1, window_bounds = array<i64: 32, 64>}, {pipeline_mode = #tpu.pipeline_mode<synchronous>, transform_indices = @transform_2, window_bounds = array<i64: 1, 64>}, {pipeline_mode = #tpu.pipeline_mode<synchronous>, transform_indices = @transform_3, window_bounds = array<i64: 64, 64>}, {pipeline_mode = #tpu.pipeline_mode<synchronous>, transform_indices = @transform_4, window_bounds = array<i64: 1, 64>}, {pipeline_mode = #tpu.pipeline_mode<synchronous>, transform_indices = @transform_5, window_bounds = array<i64: 64, 16>}, {pipeline_mode = #tpu.pipeline_mode<synchronous>, transform_indices = @transform_6, window_bounds = array<i64: 1, 16>}, {transform_indices = @transform_7, window_bounds = array<i64: 16, 16>}]} {
    %c0 = arith.constant 0 : index
    %c0_0 = arith.constant 0 : index
    %0 = vector.load %arg1[%c0, %c0_0] : memref<16x32xf32, #tpu.memory_space<vmem>>, vector<16x32xf32>
    %c0_1 = arith.constant 0 : index
    %c0_2 = arith.constant 0 : index
    %1 = vector.load %arg2[%c0_1, %c0_2] : memref<32x64xf32, #tpu.memory_space<vmem>>, vector<32x64xf32>
    %c0_3 = arith.constant 0 : index
    %c0_4 = arith.constant 0 : index
    %2 = vector.load %arg3[%c0_3, %c0_4] : memref<1x64xf32, #tpu.memory_space<vmem>>, vector<1x64xf32>
    %cst = arith.constant dense<0.000000e+00> : vector<16x64xf32>
    %3 = tpu.matmul %0, %1, %cst {dimension_numbers = #tpu.dot_dimension_numbers<[1], [0], [0], [1], [0, 0, 1, 1], [], []>} : vector<16x32xf32>, vector<32x64xf32>, vector<16x64xf32> -> vector<16x64xf32>
    %4 = vector.broadcast %2 : vector<1x64xf32> to vector<16x64xf32>
    %5 = arith.addf %3, %4 : vector<16x64xf32>
    %cst_5 = arith.constant 5.000000e-01 : f32
    %6 = vector.broadcast %cst_5 : f32 to vector<16x64xf32>
    %7 = arith.mulf %6, %5 : vector<16x64xf32>
    %cst_6 = arith.constant 0.707106769 : f32
    %8 = vector.broadcast %cst_6 : f32 to vector<16x64xf32>
    %9 = arith.mulf %5, %8 : vector<16x64xf32>
    %10 = math.erf %9 : vector<16x64xf32>
    %cst_7 = arith.constant 1.000000e+00 : f32
    %11 = vector.broadcast %cst_7 : f32 to vector<16x64xf32>
    %12 = arith.addf %11, %10 : vector<16x64xf32>
    %13 = arith.mulf %7, %12 : vector<16x64xf32>
    %c0_8 = arith.constant 0 : index
    %c0_9 = arith.constant 0 : index
    %14 = vector.load %arg4[%c0_8, %c0_9] : memref<64x64xf32, #tpu.memory_space<vmem>>, vector<64x64xf32>
    %c0_10 = arith.constant 0 : index
    %c0_11 = arith.constant 0 : index
    %15 = vector.load %arg5[%c0_10, %c0_11] : memref<1x64xf32, #tpu.memory_space<vmem>>, vector<1x64xf32>
    %cst_12 = arith.constant dense<0.000000e+00> : vector<16x64xf32>
    %16 = tpu.matmul %13, %14, %cst_12 {dimension_numbers = #tpu.dot_dimension_numbers<[1], [0], [0], [1], [0, 0, 1, 1], [], []>} : vector<16x64xf32>, vector<64x64xf32>, vector<16x64xf32> -> vector<16x64xf32>
    %17 = vector.broadcast %15 : vector<1x64xf32> to vector<16x64xf32>
    %18 = arith.addf %16, %17 : vector<16x64xf32>
    %cst_13 = arith.constant 5.000000e-01 : f32
    %19 = vector.broadcast %cst_13 : f32 to vector<16x64xf32>
    %20 = arith.mulf %19, %18 : vector<16x64xf32>
    %cst_14 = arith.constant 0.707106769 : f32
    %21 = vector.broadcast %cst_14 : f32 to vector<16x64xf32>
    %22 = arith.mulf %18, %21 : vector<16x64xf32>
    %23 = math.erf %22 : vector<16x64xf32>
    %cst_15 = arith.constant 1.000000e+00 : f32
    %24 = vector.broadcast %cst_15 : f32 to vector<16x64xf32>
    %25 = arith.addf %24, %23 : vector<16x64xf32>
    %26 = arith.mulf %20, %25 : vector<16x64xf32>
    %c0_16 = arith.constant 0 : index
    %c0_17 = arith.constant 0 : index
    %27 = vector.load %arg6[%c0_16, %c0_17] : memref<64x16xf32, #tpu.memory_space<vmem>>, vector<64x16xf32>
    %c0_18 = arith.constant 0 : index
    %c0_19 = arith.constant 0 : index
    %28 = vector.load %arg7[%c0_18, %c0_19] : memref<1x16xf32, #tpu.memory_space<vmem>>, vector<1x16xf32>
    %cst_20 = arith.constant dense<0.000000e+00> : vector<16x16xf32>
    %29 = tpu.matmul %26, %27, %cst_20 {dimension_numbers = #tpu.dot_dimension_numbers<[1], [0], [0], [1], [0, 0, 1, 1], [], []>} : vector<16x64xf32>, vector<64x16xf32>, vector<16x16xf32> -> vector<16x16xf32>
    %30 = vector.broadcast %28 : vector<1x16xf32> to vector<16x16xf32>
    %31 = arith.addf %29, %30 : vector<16x16xf32>
    %c0_21 = arith.constant 0 : index
    %c0_22 = arith.constant 0 : index
    %32 = vector.load %arg8[%c0_21, %c0_22] : memref<16x16xf32, #tpu.memory_space<vmem>>, vector<16x16xf32>
    tpu.vector_store %arg8[%c0_21, %c0_22], %31 {strides = array<i32>} : memref<16x16xf32, #tpu.memory_space<vmem>>, vector<16x16xf32>,
    return
  }
  func.func @transform_0(%arg0: i32) -> (i32, i32) {
    %c0_i32 = arith.constant 0 : i32
    %c0_i32_0 = arith.constant 0 : i32
    return %arg0, %c0_i32 : i32, i32
  }
  func.func @transform_1(%arg0: i32) -> (i32, i32) {
    %c0_i32 = arith.constant 0 : i32
    %c0_i32_0 = arith.constant 0 : i32
    %c0_i32_1 = arith.constant 0 : i32
    return %c0_i32, %c0_i32_0 : i32, i32
  }
  func.func @transform_2(%arg0: i32) -> (i32, i32) {
    %c0_i32 = arith.constant 0 : i32
    %c0_i32_0 = arith.constant 0 : i32
    %c0_i32_1 = arith.constant 0 : i32
    return %c0_i32, %c0_i32_0 : i32, i32
  }
  func.func @transform_3(%arg0: i32) -> (i32, i32) {
    %c0_i32 = arith.constant 0 : i32
    %c0_i32_0 = arith.constant 0 : i32
    %c0_i32_1 = arith.constant 0 : i32
    return %c0_i32, %c0_i32_0 : i32, i32
  }
  func.func @transform_4(%arg0: i32) -> (i32, i32) {
    %c0_i32 = arith.constant 0 : i32
    %c0_i32_0 = arith.constant 0 : i32
    %c0_i32_1 = arith.constant 0 : i32
    return %c0_i32, %c0_i32_0 : i32, i32
  }
  func.func @transform_5(%arg0: i32) -> (i32, i32) {
    %c0_i32 = arith.constant 0 : i32
    %c0_i32_0 = arith.constant 0 : i32
    %c0_i32_1 = arith.constant 0 : i32
    return %c0_i32, %c0_i32_0 : i32, i32
  }
  func.func @transform_6(%arg0: i32) -> (i32, i32) {
    %c0_i32 = arith.constant 0 : i32
    %c0_i32_0 = arith.constant 0 : i32
    %c0_i32_1 = arith.constant 0 : i32
    return %c0_i32, %c0_i32_0 : i32, i32
  }
  func.func @transform_7(%arg0: i32) -> (i32, i32) {
    %c0_i32 = arith.constant 0 : i32
    %c0_i32_0 = arith.constant 0 : i32
    return %arg0, %c0_i32 : i32, i32
  }
}

</mosaic_0001>

<llo_original>
// kernel: tpu_custom_call.1
$region0: #{tpu_custom_call.1}
  #allocation0 [shape = 'u32[]', space=smem, size = 0x4, offset = 0x4, fixed_abs, tag = 'smem constant byte address 0x4 - core index']
  #allocation1 [shape = 'u32[144,128]{1,0:T(1,128)}', space=vmem, size = 0x12000, scoped, tag = 'internal scratch']
  %s0 = inlined_call_operand.vmem [shape: f32[16,32], index: 0, kind: input, shape index: {}]
  %s1 = inlined_call_operand.hbm [shape: f32[32,64], index: 1, kind: input, shape index: {}]
  %s2 = inlined_call_operand.vmem [shape: f32[1,64], index: 2, kind: input, shape index: {}]
  %s3 = inlined_call_operand.vmem [shape: f32[64,64], index: 3, kind: input, shape index: {}]
  %s4 = inlined_call_operand.vmem [shape: f32[1,64], index: 4, kind: input, shape index: {}]
  %s5 = inlined_call_operand.vmem [shape: f32[64,16], index: 5, kind: input, shape index: {}]
  %s6 = inlined_call_operand.vmem [shape: f32[1,16], index: 6, kind: input, shape index: {}]
  %s7 = inlined_call_operand.hbm [shape: f32[16,16], index: 7, kind: output, shape index: {}]
  %s8 = sld [smem:[#allocation0]]
  $region42: #{tpu_custom_call.1} parent=0
    _
  %s10 = ssub.s32 1, %s8
  %s11 = scalar_select 0, %s10, %s8
  $region1: #{tpu_custom_call.1} parent=0
    #allocation2 [shape = 'u8[16384]{0}', space=vmem, size = 0x4000, scoped, tag = 'input window, operand 1, single buffered']
    #allocation3 [shape = 's32[1]{0}', space=sflag, size = 0x4, scoped, tag = 'scoped memory for tpu_custom_call.1']
    #allocation4 [shape = 's32[1]{0}', space=sflag, size = 0x4, scoped, tag = 'scoped memory for tpu_custom_call.1']
    #allocation5 [shape = 'u8[8192]{0}', space=vmem, size = 0x2000, scoped, tag = 'output window, operand 0, single buffered']
    %12 = vsyncpa [#allocation3], 0
    %13 = vsyncpa [#allocation4], 0
    // Predicated region
    $region2: #{tpu_custom_call.1} parent=1 // pred_check
      _
    $region3: #{tpu_custom_call.1} parent=1 // pred_check_branch
      %15 = sbr.rel (0) target = $region5
    $region4: #{tpu_custom_call.1} parent=1 // pred_region
      _
    $region5: #{tpu_custom_call.1} parent=1 // pred_fallthru
      _
    // Predicated region
    $region6: #{tpu_custom_call.1} parent=1 // pred_check
      _
    $region7: #{tpu_custom_call.1} parent=1 // pred_check_branch
      %17 = sbr.rel (0) target = $region9
    $region8: #{tpu_custom_call.1} parent=1 // pred_region
      %s19 = ssub.s32 512, 512
      %20 = vsyncadd [#allocation3], %s19
      %s21 = sshll.u32 [#allocation2], 4
      %s22 = int_to_ptr.vmem [resolvable:$true] %s21
      %27 = dma.hbm_to_vmem [thread:$0]  %s1, 512, %s22, [#allocation3], 128, 128, 8
    $region9: #{tpu_custom_call.1} parent=1 // pred_fallthru
      _
    // Predicated region
    $region10: #{tpu_custom_call.1} parent=1 // pred_check
      _
    $region11: #{tpu_custom_call.1} parent=1 // pred_check_branch
      %29 = sbr.rel (0) target = $region13
    $region12: #{tpu_custom_call.1} parent=1 // pred_region
      _
    $region13: #{tpu_custom_call.1} parent=1 // pred_fallthru
      _
    // Predicated region
    $region14: #{tpu_custom_call.1} parent=1 // pred_check
      _
    $region15: #{tpu_custom_call.1} parent=1 // pred_check_branch
      %31 = sbr.rel (0) target = $region17
    $region16: #{tpu_custom_call.1} parent=1 // pred_region
      _
    $region17: #{tpu_custom_call.1} parent=1 // pred_fallthru
      _
    // Predicated region
    $region18: #{tpu_custom_call.1} parent=1 // pred_check
      _
    $region19: #{tpu_custom_call.1} parent=1 // pred_check_branch
      %33 = sbr.rel (0) target = $region21
    $region20: #{tpu_custom_call.1} parent=1 // pred_region
      _
    $region21: #{tpu_custom_call.1} parent=1 // pred_fallthru
      _
    // Predicated region
    $region22: #{tpu_custom_call.1} parent=1 // pred_check
      _
    $region23: #{tpu_custom_call.1} parent=1 // pred_check_branch
      %35 = sbr.rel (0) target = $region25
    $region24: #{tpu_custom_call.1} parent=1 // pred_region
      _
    $region25: #{tpu_custom_call.1} parent=1 // pred_fallthru
      _
    // Predicated region
    $region26: #{tpu_custom_call.1} parent=1 // pred_check
      _
    $region27: #{tpu_custom_call.1} parent=1 // pred_check_branch
      %37 = sbr.rel (0) target = $region29
    $region28: #{tpu_custom_call.1} parent=1 // pred_region
      _
    $region29: #{tpu_custom_call.1} parent=1 // pred_fallthru
      _
    // Predicated region
    $region30: #{tpu_custom_call.1} parent=1 // pred_check
      _
    $region31: #{tpu_custom_call.1} parent=1 // pred_check_branch
      %39 = sbr.rel (0) target = $region33
    $region32: #{tpu_custom_call.1} parent=1 // pred_region
      %40 = dma.done [#allocation3], 512
    $region33: #{tpu_custom_call.1} parent=1 // pred_fallthru
      _
    %v41 = vld [vmem:[%s0] sm:$0xff]
    %v42 = vld [vmem:[%s0 + $0x8] sm:$0xff]
    %v43 = vld [vmem:[#allocation2] sm:$0xff]
    %v44 = vld [vmem:[#allocation2 + $0x8] sm:$0xff]
    %v45 = vld [vmem:[#allocation2 + $0x10] sm:$0xff]
    %v46 = vld [vmem:[#allocation2 + $0x18] sm:$0xff]
    %v47 = vld [vmem:[%s2] sm:$0x1]
    %v49 = vlaneseq
    %v50 = vshrl.u32 %v49, 7
    %v51 = vsub.s32 0, %v50
    %v52 = vrot.slane %v47, %v51
    %vm54 = vcmask 261120
    %v56 = vsel %vm54, %v41, 0
    %v59 = vsel %vm54, %v42, 0
    %61 = vmatprep.subr.mxu0 0.0
    %62 = vmatpush1.msra.mxu0 %v43
    %63 = vmatprep.subr.mxu0 0.0
    %64 = vmatpush1.msra.mxu0 %v44
    %65 = vmatprep.subr.mxu0 0.0
    %66 = vmatpush1.msra.mxu0 %v45
    %67 = vmatprep.subr.mxu0 0.0
    %68 = vmatpush1.msra.mxu0 %v46
    %69 = vmatprep.subr.mxu0 0.0
    %70 = vmatpush1.msra.mxu0 0.0
    %71 = vmatprep.subr.mxu0 0.0
    %72 = vmatpush1.msra.mxu0 0.0
    %73 = vmatprep.subr.mxu0 0.0
    %74 = vmatpush1.msra.mxu0 0.0
    %75 = vmatprep.subr.mxu0 0.0
    %76 = vmatpush1.msra.mxu0 0.0
    %77 = vmatprep.subr.mxu0 0.0
    %78 = vmatpush1.msra.mxu0 0.0
    %79 = vmatprep.subr.mxu0 0.0
    %80 = vmatpush1.msra.mxu0 0.0
    %81 = vmatprep.subr.mxu0 0.0
    %82 = vmatpush1.msra.mxu0 0.0
    %83 = vmatprep.subr.mxu0 0.0
    %84 = vmatpush1.msra.mxu0 0.0
    %85 = vmatprep.subr.mxu0 0.0
    %86 = vmatpush1.msra.mxu0 0.0
    %87 = vmatprep.subr.mxu0 0.0
    %88 = vmatpush1.msra.mxu0 0.0
    %89 = vmatprep.subr.mxu0 0.0
    %90 = vmatpush1.msra.mxu0 0.0
    %91 = vmatprep.subr.mxu0 0.0
    %92 = vmatpush1.msra.mxu0 0.0
    %93 = vmatprep.subr.mxu0 0.0
    %94 = vmatpush1.msra.mxu0 0.0
    %95 = vmatprep.subr.mxu0 0.0
    %96 = vmatpush1.msra.mxu0 0.0
    %97 = vmatprep.subr.mxu0 0.0
    %98 = vmatpush1.msra.mxu0 0.0
    %99 = vmatprep.subr.mxu0 0.0
    %100 = vmatpush1.msra.mxu0 0.0
    %101 = vmatprep.subr.mxu0 0.0
    %102 = vmatpush1.msra.mxu0 0.0
    %103 = vmatprep.subr.mxu0 0.0
    %104 = vmatpush1.msra.mxu0 0.0
    %105 = vmatprep.subr.mxu0 0.0
    %106 = vmatpush1.msra.mxu0 0.0
    %107 = vmatprep.subr.mxu0 0.0
    %108 = vmatpush1.msra.mxu0 0.0
    %109 = vmatprep.subr.mxu0 0.0
    %110 = vmatpush1.msra.mxu0 0.0
    %111 = vmatprep.subr.mxu0 0.0
    %112 = vmatpush1.msra.mxu0 0.0
    %113 = vmatprep.subr.mxu0 0.0
    %114 = vmatpush1.msra.mxu0 0.0
    %115 = vmatprep.subr.mxu0 0.0
    %116 = vmatpush1.msra.mxu0 0.0
    %117 = vmatprep.subr.mxu0 0.0
    %118 = vmatpush1.msra.mxu0 0.0
    %119 = vmatprep.subr.mxu0 0.0
    %120 = vmatpush1.msra.mxu0 0.0
    %121 = vmatprep.subr.mxu0 0.0
    %122 = vmatpush1.msra.mxu0 0.0
    %123 = vmatprep.subr.mxu0 0.0
    %124 = vmatpush1.msra.mxu0 0.0
    %125 = vmatprep.mubr.f32.mxu0 0.0
    %126 = vmatmul.mubr.f32.gmra.mrb[0].mxu0 %v56
    %v127 = vpop.f32.mrb[0].mxu0
    %v128 = vadd.f32 %v52, %v127
    %v129 = vpop.f32.mrb[0].mxu0
    %130 = vmatprep.mubr.f32.mxu0 0.0
    %131 = vmatmul.mubr.f32.gmra.mrb[0].mxu0 %v59
    %v132 = vpop.f32.mrb[0].mxu0
    %v133 = vadd.f32 %v52, %v132
    %v134 = vpop.f32.mrb[0].mxu0
    %135 = vdwg.mxu0
    %v136 = vmul.f32 %v128, 0.5
    %v137 = vmul.f32 %v133, 0.5
    %v138 = vmul.f32 %v128, 0.70710677
    %v139 = vmul.f32 %v133, 0.70710677
    %v140 = verf.f32.pop %v138
    %v141 = verf.f32.pop %v139
    %v142 = vadd.f32 %v140, 1.0
    %v143 = vadd.f32 %v141, 1.0
    %v144 = vmul.f32 %v136, %v142
    %v145 = vmul.f32 %v137, %v143
    %v146 = vld [vmem:[%s3] sm:$0xff]
    %v147 = vld [vmem:[%s3 + $0x8] sm:$0xff]
    %v148 = vld [vmem:[%s3 + $0x10] sm:$0xff]
    %v149 = vld [vmem:[%s3 + $0x18] sm:$0xff]
    %v150 = vld [vmem:[%s3 + $0x20] sm:$0xff]
    %v151 = vld [vmem:[%s3 + $0x28] sm:$0xff]
    %v152 = vld [vmem:[%s3 + $0x30] sm:$0xff]
    %v153 = vld [vmem:[%s3 + $0x38] sm:$0xff]
    %v154 = vld [vmem:[%s4] sm:$0x1]
    %v156 = vlaneseq
    %v157 = vshrl.u32 %v156, 7
    %v158 = vsub.s32 0, %v157
    %v159 = vrot.slane %v154, %v158
    %vm161 = vcmask 523264
    %v163 = vsel %vm161, %v144, 0
    %v166 = vsel %vm161, %v145, 0
    %168 = vmatprep.subr.mxu0 0.0
    %169 = vmatpush1.msra.mxu0 %v146
    %170 = vmatprep.subr.mxu0 0.0
    %171 = vmatpush1.msra.mxu0 %v147
    %172 = vmatprep.subr.mxu0 0.0
    %173 = vmatpush1.msra.mxu0 %v148
    %174 = vmatprep.subr.mxu0 0.0
    %175 = vmatpush1.msra.mxu0 %v149
    %176 = vmatprep.subr.mxu0 0.0
    %177 = vmatpush1.msra.mxu0 %v150
    %178 = vmatprep.subr.mxu0 0.0
    %179 = vmatpush1.msra.mxu0 %v151
    %180 = vmatprep.subr.mxu0 0.0
    %181 = vmatpush1.msra.mxu0 %v152
    %182 = vmatprep.subr.mxu0 0.0
    %183 = vmatpush1.msra.mxu0 %v153
    %184 = vmatprep.subr.mxu0 0.0
    %185 = vmatpush1.msra.mxu0 0.0
    %186 = vmatprep.subr.mxu0 0.0
    %187 = vmatpush1.msra.mxu0 0.0
    %188 = vmatprep.subr.mxu0 0.0
    %189 = vmatpush1.msra.mxu0 0.0
    %190 = vmatprep.subr.mxu0 0.0
    %191 = vmatpush1.msra.mxu0 0.0
    %192 = vmatprep.subr.mxu0 0.0
    %193 = vmatpush1.msra.mxu0 0.0
    %194 = vmatprep.subr.mxu0 0.0
    %195 = vmatpush1.msra.mxu0 0.0
    %196 = vmatprep.subr.mxu0 0.0
    %197 = vmatpush1.msra.mxu0 0.0
    %198 = vmatprep.subr.mxu0 0.0
    %199 = vmatpush1.msra.mxu0 0.0
    %200 = vmatprep.subr.mxu0 0.0
    %201 = vmatpush1.msra.mxu0 0.0
    %202 = vmatprep.subr.mxu0 0.0
    %203 = vmatpush1.msra.mxu0 0.0
    %204 = vmatprep.subr.mxu0 0.0
    %205 = vmatpush1.msra.mxu0 0.0
    %206 = vmatprep.subr.mxu0 0.0
    %207 = vmatpush1.msra.mxu0 0.0
    %208 = vmatprep.subr.mxu0 0.0
    %209 = vmatpush1.msra.mxu0 0.0
    %210 = vmatprep.subr.mxu0 0.0
    %211 = vmatpush1.msra.mxu0 0.0
    %212 = vmatprep.subr.mxu0 0.0
    %213 = vmatpush1.msra.mxu0 0.0
    %214 = vmatprep.subr.mxu0 0.0
    %215 = vmatpush1.msra.mxu0 0.0
    %216 = vmatprep.subr.mxu0 0.0
    %217 = vmatpush1.msra.mxu0 0.0
    %218 = vmatprep.subr.mxu0 0.0
    %219 = vmatpush1.msra.mxu0 0.0
    %220 = vmatprep.subr.mxu0 0.0
    %221 = vmatpush1.msra.mxu0 0.0
    %222 = vmatprep.subr.mxu0 0.0
    %223 = vmatpush1.msra.mxu0 0.0
    %224 = vmatprep.subr.mxu0 0.0
    %225 = vmatpush1.msra.mxu0 0.0
    %226 = vmatprep.subr.mxu0 0.0
    %227 = vmatpush1.msra.mxu0 0.0
    %228 = vmatprep.subr.mxu0 0.0
    %229 = vmatpush1.msra.mxu0 0.0
    %230 = vmatprep.subr.mxu0 0.0
    %231 = vmatpush1.msra.mxu0 0.0
    %232 = vmatprep.mubr.f32.mxu0 0.0
    %233 = vmatmul.mubr.f32.gmra.mrb[0].mxu0 %v163
    %v234 = vpop.f32.mrb[0].mxu0
    %v235 = vadd.f32 %v159, %v234
    %v236 = vpop.f32.mrb[0].mxu0
    %237 = vmatprep.mubr.f32.mxu0 0.0
    %238 = vmatmul.mubr.f32.gmra.mrb[0].mxu0 %v166
    %v239 = vpop.f32.mrb[0].mxu0
    %v240 = vadd.f32 %v159, %v239
    %v241 = vpop.f32.mrb[0].mxu0
    %242 = vdwg.mxu0
    %v243 = vmul.f32 %v235, 0.5
    %v244 = vmul.f32 %v240, 0.5
    %v245 = vmul.f32 %v235, 0.70710677
    %v246 = vmul.f32 %v240, 0.70710677
    %v247 = verf.f32.pop %v245
    %v248 = verf.f32.pop %v246
    %v249 = vadd.f32 %v247, 1.0
    %v250 = vadd.f32 %v248, 1.0
    %v251 = vmul.f32 %v243, %v249
    %v252 = vmul.f32 %v244, %v250
    %v253 = vld [vmem:[%s5] sm:$0xff]
    %v254 = vld [vmem:[%s5 + $0x8] sm:$0xff]
    %v255 = vld [vmem:[%s5 + $0x10] sm:$0xff]
    %v256 = vld [vmem:[%s5 + $0x18] sm:$0xff]
    %v257 = vld [vmem:[%s5 + $0x20] sm:$0xff]
    %v258 = vld [vmem:[%s5 + $0x28] sm:$0xff]
    %v259 = vld [vmem:[%s5 + $0x30] sm:$0xff]
    %v260 = vld [vmem:[%s5 + $0x38] sm:$0xff]
    %v261 = vld [vmem:[%s6] sm:$0x1]
    %v263 = vlaneseq
    %v264 = vshrl.u32 %v263, 7
    %v265 = vsub.s32 0, %v264
    %v266 = vrot.slane %v261, %v265
    %v269 = vsel %vm161, %v251, 0
    %v272 = vsel %vm161, %v252, 0
    %274 = vmatprep.subr.mxu0 0.0
    %275 = vmatpush1.msra.mxu0 %v253
    %276 = vmatprep.subr.mxu0 0.0
    %277 = vmatpush1.msra.mxu0 %v254
    %278 = vmatprep.subr.mxu0 0.0
    %279 = vmatpush1.msra.mxu0 %v255
    %280 = vmatprep.subr.mxu0 0.0
    %281 = vmatpush1.msra.mxu0 %v256
    %282 = vmatprep.subr.mxu0 0.0
    %283 = vmatpush1.msra.mxu0 %v257
    %284 = vmatprep.subr.mxu0 0.0
    %285 = vmatpush1.msra.mxu0 %v258
    %286 = vmatprep.subr.mxu0 0.0
    %287 = vmatpush1.msra.mxu0 %v259
    %288 = vmatprep.subr.mxu0 0.0
    %289 = vmatpush1.msra.mxu0 %v260
    %290 = vmatprep.subr.mxu0 0.0
    %291 = vmatpush1.msra.mxu0 0.0
    %292 = vmatprep.subr.mxu0 0.0
    %293 = vmatpush1.msra.mxu0 0.0
    %294 = vmatprep.subr.mxu0 0.0
    %295 = vmatpush1.msra.mxu0 0.0
    %296 = vmatprep.subr.mxu0 0.0
    %297 = vmatpush1.msra.mxu0 0.0
    %298 = vmatprep.subr.mxu0 0.0
    %299 = vmatpush1.msra.mxu0 0.0
    %300 = vmatprep.subr.mxu0 0.0
    %301 = vmatpush1.msra.mxu0 0.0
    %302 = vmatprep.subr.mxu0 0.0
    %303 = vmatpush1.msra.mxu0 0.0
    %304 = vmatprep.subr.mxu0 0.0
    %305 = vmatpush1.msra.mxu0 0.0
    %306 = vmatprep.subr.mxu0 0.0
    %307 = vmatpush1.msra.mxu0 0.0
    %308 = vmatprep.subr.mxu0 0.0
    %309 = vmatpush1.msra.mxu0 0.0
    %310 = vmatprep.subr.mxu0 0.0
    %311 = vmatpush1.msra.mxu0 0.0
    %312 = vmatprep.subr.mxu0 0.0
    %313 = vmatpush1.msra.mxu0 0.0
    %314 = vmatprep.subr.mxu0 0.0
    %315 = vmatpush1.msra.mxu0 0.0
    %316 = vmatprep.subr.mxu0 0.0
    %317 = vmatpush1.msra.mxu0 0.0
    %318 = vmatprep.subr.mxu0 0.0
    %319 = vmatpush1.msra.mxu0 0.0
    %320 = vmatprep.subr.mxu0 0.0
    %321 = vmatpush1.msra.mxu0 0.0
    %322 = vmatprep.subr.mxu0 0.0
    %323 = vmatpush1.msra.mxu0 0.0
    %324 = vmatprep.subr.mxu0 0.0
    %325 = vmatpush1.msra.mxu0 0.0
    %326 = vmatprep.subr.mxu0 0.0
    %327 = vmatpush1.msra.mxu0 0.0
    %328 = vmatprep.subr.mxu0 0.0
    %329 = vmatpush1.msra.mxu0 0.0
    %330 = vmatprep.subr.mxu0 0.0
    %331 = vmatpush1.msra.mxu0 0.0
    %332 = vmatprep.subr.mxu0 0.0
    %333 = vmatpush1.msra.mxu0 0.0
    %334 = vmatprep.subr.mxu0 0.0
    %335 = vmatpush1.msra.mxu0 0.0
    %336 = vmatprep.subr.mxu0 0.0
    %337 = vmatpush1.msra.mxu0 0.0
    %338 = vmatprep.mubr.f32.mxu0 0.0
    %339 = vmatmul.mubr.f32.gmra.mrb[0].mxu0 %v269
    %v340 = vpop.f32.mrb[0].mxu0
    %v341 = vadd.f32 %v266, %v340
    %v342 = vpop.f32.mrb[0].mxu0
    %343 = vmatprep.mubr.f32.mxu0 0.0
    %344 = vmatmul.mubr.f32.gmra.mrb[0].mxu0 %v272
    %v345 = vpop.f32.mrb[0].mxu0
    %v346 = vadd.f32 %v266, %v345
    %v347 = vpop.f32.mrb[0].mxu0
    %348 = vdwg.mxu0
    %vm349 = vcmask 130048
    %350 = vst.msk [vmem:[#allocation5] sm:$0xff] %vm349, %v341
    %351 = vst.msk [vmem:[#allocation5 + $0x8] sm:$0xff] %vm349, %v346
    // Predicated region
    $region34: #{tpu_custom_call.1} parent=1 // pred_check
      _
    $region35: #{tpu_custom_call.1} parent=1 // pred_check_branch
      %353 = sbr.rel (0) target = $region37
    $region36: #{tpu_custom_call.1} parent=1 // pred_region
      %s355 = ssub.s32 256, 256
      %356 = vsyncadd [#allocation4], %s355
      %s357 = sshll.u32 [#allocation5], 4
      %s358 = int_to_ptr.vmem [resolvable:$true] %s357
      %363 = dma.vmem_to_hbm [thread:$0]  %s358, 256, %s7, [#allocation4], 128, 128, 8
    $region37: #{tpu_custom_call.1} parent=1 // pred_fallthru
      _
    // Predicated region
    $region38: #{tpu_custom_call.1} parent=1 // pred_check
      _
    $region39: #{tpu_custom_call.1} parent=1 // pred_check_branch
      %365 = sbr.rel (0) target = $region41
    $region40: #{tpu_custom_call.1} parent=1 // pred_region
      %366 = dma.done [#allocation4], 256
    $region41: #{tpu_custom_call.1} parent=1 // pred_fallthru
      _
    %367 = vsyncpa [#allocation3], 1
    %368 = vsyncpa [#allocation4], 1

</llo_original>
